<compile_context>
chip_gen: v5e
topology: v5e:2x2
jax: 0.10.0
libtpu: 0.0.40
codegen_flags: <defaults>
</compile_context>

<pallas_src>
import functools

import jax
import jax.numpy as jnp
from jax import lax
from jax.experimental import pallas as pl
from jax.experimental.pallas import tpu as pltpu


# ---------------------------------------------------------------------------
# Kernel 1: fused K/V projection, emitted head-major (B, H, T, D).
# ---------------------------------------------------------------------------
def _kv_proj_kernel(x_ref, w_ref, b_ref, k_ref, v_ref, *, num_heads, head_dim):
    # x_ref : (TS, E)   compute dtype (bf16)
    # w_ref : (E, 2E)   compute dtype; [Wk | Wv], pre-transposed
    # b_ref : (1, 2E)   f32;           [bk | bv]
    # k_ref/v_ref : (H, TS, D) compute dtype
    e = num_heads * head_dim
    y = jnp.dot(x_ref[...], w_ref[...],
                preferred_element_type=jnp.float32) + b_ref[...]
    # Head relayout happens once per element here (cheap) instead of on every
    # KV step inside the attention kernel (expensive).
    for h in range(num_heads):
        lo = h * head_dim
        k_ref[h] = y[:, lo:lo + head_dim].astype(k_ref.dtype)
        v_ref[h] = y[:, e + lo:e + lo + head_dim].astype(v_ref.dtype)


# ---------------------------------------------------------------------------
# Kernel 2: fused Q projection + flash attention + output projection.
# ---------------------------------------------------------------------------
def _flash_attn_kernel(x_ref, k_ref, v_ref, wq_ref, bq_ref, wo_ref, bo_ref,
                       o_ref, q_scr, m_scr, l_scr, acc_scr, ctx_scr,
                       *, num_heads, head_dim, exp_dtype):
    # x_ref : (TQ, E)         k_ref/v_ref : (H, TK, D)   (batch dim squeezed)
    # wq_ref: (E, E) scaled   bq_ref: (1, E) f32 scaled
    # wo_ref: (E, E)          bo_ref: (1, E) f32         o_ref : (TQ, E)
    # q_scr : (H, TQ, D) bf16    m_scr/l_scr: (H, TQ, 1) f32
    # acc_scr: (H, TQ, D) f32    ctx_scr: (TQ, E) bf16
    ki = pl.program_id(2)

    @pl.when(ki == 0)
    def _():
        m_scr[...] = jnp.full(m_scr.shape, -jnp.inf, dtype=m_scr.dtype)
        l_scr[...] = jnp.zeros(l_scr.shape, dtype=l_scr.dtype)
        acc_scr[...] = jnp.zeros(acc_scr.shape, dtype=acc_scr.dtype)
        # Fused Q projection (1/sqrt(D) already folded into wq/bq), stored
        # head-major so the per-KV-step head reads are lane-aligned.
        q = jnp.dot(x_ref[...], wq_ref[...],
                    preferred_element_type=jnp.float32) + bq_ref[...]
        for h in range(num_heads):
            lo = h * head_dim
            q_scr[h] = q[:, lo:lo + head_dim].astype(q_scr.dtype)

    # Per-head ref loads inside the loop (bounded live ranges, no spills).
    # TODO(synk): head_dim < 128 underutilizes the 256-wide MXU K dim on
    # v6e/v7x; grouping heads per MXU pass would recover that when MXU-bound.
    for h in range(num_heads):                      # static unroll over heads
        q_h = q_scr[h]                              # (TQ, D) bf16
        k_h = k_ref[h]                              # (TK, D) bf16
        v_h = v_ref[h]                              # (TK, D) bf16

        # QK^T without an explicit transpose: contract the last dim of both.
        s = lax.dot_general(q_h, k_h,
                            dimension_numbers=(((1,), (1,)), ((), ())),
                            preferred_element_type=jnp.float32)  # (TQ, TK) f32

        m_prev = m_scr[h]                                        # (TQ, 1) f32
        m_new = jnp.maximum(m_prev, jnp.max(s, axis=-1, keepdims=True))
        alpha = jnp.exp(m_prev - m_new)                          # f32, tiny
        # exp in bf16 on v6e/v7x (bf16 EUP), f32 on older parts; state stays f32.
        p = jnp.exp((s - m_new).astype(exp_dtype))
        l_scr[h] = alpha * l_scr[h] + jnp.sum(
            p.astype(jnp.float32), axis=-1, keepdims=True)
        acc_scr[h] = alpha * acc_scr[h] + jnp.dot(
            p.astype(v_h.dtype), v_h, preferred_element_type=jnp.float32)
        m_scr[h] = m_new

    # Last KV tile: normalize contexts into a (TQ, E) bf16 scratch (head
    # offsets), then ONE full-K (TQ,E)@(E,E) output-projection matmul.
    @pl.when(ki == pl.num_programs(2) - 1)
    def _():
        # TODO(synk): dropout on attention probs omitted (p=0.0 / eval mode).
        for h in range(num_heads):
            lo = h * head_dim
            ctx_scr[:, lo:lo + head_dim] = (
                acc_scr[h] * pl.reciprocal(l_scr[h], approx=True)
            ).astype(ctx_scr.dtype)
        out = jnp.dot(ctx_scr[...], wo_ref[...],
                      preferred_element_type=jnp.float32) + bo_ref[...]
        o_ref[...] = out.astype(o_ref.dtype)


def _pick_tile(n, preferred):
    for t in preferred:
        if t <= n and n % t == 0:
            return t
    return n


def multi_head_attention(x, params, num_heads, *, compute_dtype=jnp.bfloat16):
    """x: (B, T, E); params: dict of PyTorch-convention Linear params (f32)."""
    B, T, E = x.shape
    head_dim = E // num_heads
    assert head_dim * num_heads == E
    scaling = float(head_dim) ** -0.5
    out_dtype = x.dtype

    # ---- chip-generation knobs --------------------------------------------
    kind = jax.devices()[0].device_kind.lower()
    is_old_gen = any(v in kind for v in ("v2", "v3", "v4", "v5"))
    # bf16 EUP only on v6e/v7x; keep f32 exp on older parts.
    exp_dtype = jnp.float32 if is_old_gen else jnp.bfloat16
    # 128 MiB VMEM parts (v5e/v6e) can take much larger scoped limits / tiles;
    # v7x (and unknown) stays under its 64 MiB physical VMEM.
    big_vmem = any(v in kind for v in ("v5", "v6"))
    vmem_cap = (100 if big_vmem else 48) * 1024 * 1024

    # ---- wrapper-side glue (runs once in XLA) -----------------------------
    # Pre-transpose to (E_in, E_out); fold 1/sqrt(D) into Wq/bq; stack k/v
    # weights so their projection is one wide matmul. Weights bf16, biases f32.
    wq_t = (params["wq"].T * scaling).astype(compute_dtype)
    bq = (params["bq"] * scaling).reshape(1, E).astype(jnp.float32)
    w_kv = jnp.concatenate([params["wk"].T, params["wv"].T],
                           axis=1).astype(compute_dtype)
    b_kv = jnp.concatenate([params["bk"], params["bv"]]
                           ).reshape(1, 2 * E).astype(jnp.float32)
    wo_t = params["wo"].T.astype(compute_dtype)
    bo = params["bo"].reshape(1, E).astype(jnp.float32)
    x_c = x.astype(compute_dtype)

    # Sequence tiles (fall back to the full extent for tiny T, still legal).
    ts = _pick_tile(T, (512, 256, 128))                       # K/V proj tile
    tq = _pick_tile(T, (512, 256, 128))                       # query tile
    tk = _pick_tile(T, (1024, 512, 256, 128) if big_vmem
                    else (512, 256, 128))                     # streamed KV tile

    # ---- Kernel 1: fused K/V projection, head-major output ----------------
    kv_kernel = functools.partial(_kv_proj_kernel, num_heads=num_heads,
                                  head_dim=head_dim)
    k, v = pl.pallas_call(
        kv_kernel,
        out_shape=(jax.ShapeDtypeStruct((B, num_heads, T, head_dim),
                                        compute_dtype),) * 2,
        grid=(B, T // ts),
        in_specs=[
            pl.BlockSpec((None, ts, E), lambda b, i: (b, i, 0)),      # x
            pl.BlockSpec((E, 2 * E), lambda b, i: (0, 0)),            # w_kv
            pl.BlockSpec((1, 2 * E), lambda b, i: (0, 0)),            # b_kv
        ],
        out_specs=(
            pl.BlockSpec((None, num_heads, ts, head_dim),
                         lambda b, i: (b, 0, i, 0)),
            pl.BlockSpec((None, num_heads, ts, head_dim),
                         lambda b, i: (b, 0, i, 0)),
        ),
        compiler_params=pltpu.CompilerParams(
            dimension_semantics=("parallel", "parallel"),
            vmem_limit_bytes=vmem_cap),
    )(x_c, w_kv, b_kv)

    # ---- Kernel 2: fused Q-proj + flash attention + output projection -----
    attn_kernel = functools.partial(_flash_attn_kernel, num_heads=num_heads,
                                    head_dim=head_dim, exp_dtype=exp_dtype)
    out = pl.pallas_call(
        attn_kernel,
        out_shape=jax.ShapeDtypeStruct((B, T, E), out_dtype),
        grid=(B, T // tq, T // tk),
        in_specs=[
            pl.BlockSpec((None, tq, E), lambda b, qi, ki: (b, qi, 0)),    # x
            pl.BlockSpec((None, num_heads, tk, head_dim),
                         lambda b, qi, ki: (b, 0, ki, 0)),                # k
            pl.BlockSpec((None, num_heads, tk, head_dim),
                         lambda b, qi, ki: (b, 0, ki, 0)),                # v
            pl.BlockSpec((E, E), lambda b, qi, ki: (0, 0)),               # wq
            pl.BlockSpec((1, E), lambda b, qi, ki: (0, 0)),               # bq
            pl.BlockSpec((E, E), lambda b, qi, ki: (0, 0)),               # wo
            pl.BlockSpec((1, E), lambda b, qi, ki: (0, 0)),               # bo
        ],
        out_specs=pl.BlockSpec((None, tq, E), lambda b, qi, ki: (b, qi, 0)),
        scratch_shapes=[
            pltpu.VMEM((num_heads, tq, head_dim), compute_dtype),  # q head-major
            pltpu.VMEM((num_heads, tq, 1), jnp.float32),           # running max
            pltpu.VMEM((num_heads, tq, 1), jnp.float32),           # running sum
            pltpu.VMEM((num_heads, tq, head_dim), jnp.float32),    # ctx accum
            pltpu.VMEM((tq, E), compute_dtype),                    # ctx for out-proj
        ],
        compiler_params=pltpu.CompilerParams(
            dimension_semantics=("parallel", "parallel", "arbitrary"),
            vmem_limit_bytes=vmem_cap),
    )(x_c, k, v, wq_t, bq, wo_t, bo)
    return out


def _reference_mha(x, params, num_heads):
    """Plain-JAX f32 reference mirroring the PyTorch forward."""
    B, T, E = x.shape
    D = E // num_heads
    scaling = float(D) ** -0.5
    q = (x @ params["wq"].T + params["bq"]) * scaling
    k = x @ params["wk"].T + params["bk"]
    v = x @ params["wv"].T + params["bv"]

    def shape(t):  # (B,T,E) -> (B,H,T,D)
        return t.reshape(B, T, num_heads, D).transpose(0, 2, 1, 3)

    qh, kh, vh = shape(q), shape(k), shape(v)
    w = jnp.einsum("bhtd,bhsd->bhts", qh, kh)
    w = jax.nn.softmax(w, axis=-1)
    ctx = jnp.einsum("bhts,bhsd->bhtd", w, vh)
    ctx = ctx.transpose(0, 2, 1, 3).reshape(B, T, E)
    return ctx @ params["wo"].T + params["bo"]


if __name__ == "__main__":
    B, T, E, H = 2, 8, 32, 4

    key = jax.random.PRNGKey(0)
    keys = jax.random.split(key, 9)
    scale = 0.1
    params = {
        "wq": jax.random.normal(keys[0], (E, E), jnp.float32) * scale,
        "bq": jax.random.normal(keys[1], (E,), jnp.float32) * scale,
        "wk": jax.random.normal(keys[2], (E, E), jnp.float32) * scale,
        "bk": jax.random.normal(keys[3], (E,), jnp.float32) * scale,
        "wv": jax.random.normal(keys[4], (E, E), jnp.float32) * scale,
        "bv": jax.random.normal(keys[5], (E,), jnp.float32) * scale,
        "wo": jax.random.normal(keys[6], (E, E), jnp.float32) * scale,
        "bo": jax.random.normal(keys[7], (E,), jnp.float32) * scale,
    }
    x = jax.random.normal(keys[8], (B, T, E), jnp.float32)

    out = multi_head_attention(x, params, H)
    out = jax.block_until_ready(out)

    ref = _reference_mha(x, params, H)
    assert out.shape == (B, T, E)
    # bf16 weights/activations (f32 accumulation / f32 softmax state) =>
    # loosen tolerance vs. the f32 reference.
    err = float(jnp.max(jnp.abs(out.astype(jnp.float32) - ref)))
    assert err < 5e-2, f"max err {err}"

    print("KERNEL_OK")
</pallas_src>

<mosaic_0001>
module attributes {stable_mosaic.version = 11 : i64} {
  func.func @_kv_proj_kernel(%arg0: i32, %arg1: i32, %arg2: memref<1x8x32xbf16, #tpu.memory_space<vmem>>, %arg3: memref<32x64xbf16, #tpu.memory_space<vmem>>, %arg4: memref<1x64xf32, #tpu.memory_space<vmem>>, %arg5: memref<1x4x8x8xbf16, #tpu.memory_space<vmem>>, %arg6: memref<1x4x8x8xbf16, #tpu.memory_space<vmem>>) attributes {dimension_semantics = [#tpu.dimension_semantics<parallel>, #tpu.dimension_semantics<parallel>], iteration_bounds = array<i64: 2, 1>, scalar_prefetch = 0 : i64, scratch_operands = 0 : i64, tpu.core_type = #tpu.core_type<tc>, window_params = [{transform_indices = @transform_0, window_bounds = array<i64: 1, 8, 32>}, {pipeline_mode = #tpu.pipeline_mode<synchronous>, transform_indices = @transform_1, window_bounds = array<i64: 32, 64>}, {pipeline_mode = #tpu.pipeline_mode<synchronous>, transform_indices = @transform_2, window_bounds = array<i64: 1, 64>}, {transform_indices = @transform_3, window_bounds = array<i64: 1, 4, 8, 8>}, {transform_indices = @transform_4, window_bounds = array<i64: 1, 4, 8, 8>}]} {
    %c0 = arith.constant 0 : index
    %c0_0 = arith.constant 0 : index
    %c0_1 = arith.constant 0 : index
    %0 = vector.load %arg2[%c0, %c0_0, %c0_1] : memref<1x8x32xbf16, #tpu.memory_space<vmem>>, vector<1x8x32xbf16>
    %1 = vector.shape_cast %0 : vector<1x8x32xbf16> to vector<8x32xbf16>
    %c0_2 = arith.constant 0 : index
    %c0_3 = arith.constant 0 : index
    %2 = vector.load %arg3[%c0_2, %c0_3] : memref<32x64xbf16, #tpu.memory_space<vmem>>, vector<32x64xbf16>
    %cst = arith.constant dense<0.000000e+00> : vector<8x64xf32>
    %3 = tpu.matmul %1, %2, %cst {dimension_numbers = #tpu.dot_dimension_numbers<[1], [0], [0], [1], [0, 0, 1, 1], [], []>} : vector<8x32xbf16>, vector<32x64xbf16>, vector<8x64xf32> -> vector<8x64xf32>
    %c0_4 = arith.constant 0 : index
    %c0_5 = arith.constant 0 : index
    %4 = vector.load %arg4[%c0_4, %c0_5] : memref<1x64xf32, #tpu.memory_space<vmem>>, vector<1x64xf32>
    %5 = vector.broadcast %4 : vector<1x64xf32> to vector<8x64xf32>
    %6 = arith.addf %3, %5 : vector<8x64xf32>
    %7 = vector.extract_strided_slice %6 {offsets = [0, 0], sizes = [8, 8], strides = [1, 1]} : vector<8x64xf32> to vector<8x8xf32>
    %8 = arith.truncf %7 : vector<8x8xf32> to vector<8x8xbf16>
    %c0_6 = arith.constant 0 : index
    %c0_7 = arith.constant 0 : index
    %c0_8 = arith.constant 0 : index
    %c0_9 = arith.constant 0 : index
    %9 = vector.load %arg5[%c0_6, %c0_7, %c0_8, %c0_9] : memref<1x4x8x8xbf16, #tpu.memory_space<vmem>>, vector<1x1x8x8xbf16>
    %10 = vector.shape_cast %9 : vector<1x1x8x8xbf16> to vector<8x8xbf16>
    %11 = vector.shape_cast %8 : vector<8x8xbf16> to vector<1x1x8x8xbf16>
    tpu.vector_store %arg5[%c0_6, %c0_7, %c0_8, %c0_9], %11 {strides = array<i32>} : memref<1x4x8x8xbf16, #tpu.memory_space<vmem>>, vector<1x1x8x8xbf16>,
    %12 = vector.extract_strided_slice %6 {offsets = [0, 32], sizes = [8, 8], strides = [1, 1]} : vector<8x64xf32> to vector<8x8xf32>
    %13 = arith.truncf %12 : vector<8x8xf32> to vector<8x8xbf16>
    %c0_10 = arith.constant 0 : index
    %c0_11 = arith.constant 0 : index
    %c0_12 = arith.constant 0 : index
    %c0_13 = arith.constant 0 : index
    %14 = vector.load %arg6[%c0_10, %c0_11, %c0_12, %c0_13] : memref<1x4x8x8xbf16, #tpu.memory_space<vmem>>, vector<1x1x8x8xbf16>
    %15 = vector.shape_cast %14 : vector<1x1x8x8xbf16> to vector<8x8xbf16>
    %16 = vector.shape_cast %13 : vector<8x8xbf16> to vector<1x1x8x8xbf16>
    tpu.vector_store %arg6[%c0_10, %c0_11, %c0_12, %c0_13], %16 {strides = array<i32>} : memref<1x4x8x8xbf16, #tpu.memory_space<vmem>>, vector<1x1x8x8xbf16>,
    %17 = vector.extract_strided_slice %6 {offsets = [0, 8], sizes = [8, 8], strides = [1, 1]} : vector<8x64xf32> to vector<8x8xf32>
    %18 = arith.truncf %17 : vector<8x8xf32> to vector<8x8xbf16>
    %c0_14 = arith.constant 0 : index
    %c1 = arith.constant 1 : index
    %c0_15 = arith.constant 0 : index
    %c0_16 = arith.constant 0 : index
    %19 = vector.load %arg5[%c0_14, %c1, %c0_15, %c0_16] : memref<1x4x8x8xbf16, #tpu.memory_space<vmem>>, vector<1x1x8x8xbf16>
    %20 = vector.shape_cast %19 : vector<1x1x8x8xbf16> to vector<8x8xbf16>
    %21 = vector.shape_cast %18 : vector<8x8xbf16> to vector<1x1x8x8xbf16>
    tpu.vector_store %arg5[%c0_14, %c1, %c0_15, %c0_16], %21 {strides = array<i32>} : memref<1x4x8x8xbf16, #tpu.memory_space<vmem>>, vector<1x1x8x8xbf16>,
    %22 = vector.extract_strided_slice %6 {offsets = [0, 40], sizes = [8, 8], strides = [1, 1]} : vector<8x64xf32> to vector<8x8xf32>
    %23 = arith.truncf %22 : vector<8x8xf32> to vector<8x8xbf16>
    %c0_17 = arith.constant 0 : index
    %c1_18 = arith.constant 1 : index
    %c0_19 = arith.constant 0 : index
    %c0_20 = arith.constant 0 : index
    %24 = vector.load %arg6[%c0_17, %c1_18, %c0_19, %c0_20] : memref<1x4x8x8xbf16, #tpu.memory_space<vmem>>, vector<1x1x8x8xbf16>
    %25 = vector.shape_cast %24 : vector<1x1x8x8xbf16> to vector<8x8xbf16>
    %26 = vector.shape_cast %23 : vector<8x8xbf16> to vector<1x1x8x8xbf16>
    tpu.vector_store %arg6[%c0_17, %c1_18, %c0_19, %c0_20], %26 {strides = array<i32>} : memref<1x4x8x8xbf16, #tpu.memory_space<vmem>>, vector<1x1x8x8xbf16>,
    %27 = vector.extract_strided_slice %6 {offsets = [0, 16], sizes = [8, 8], strides = [1, 1]} : vector<8x64xf32> to vector<8x8xf32>
    %28 = arith.truncf %27 : vector<8x8xf32> to vector<8x8xbf16>
    %c0_21 = arith.constant 0 : index
    %c2 = arith.constant 2 : index
    %c0_22 = arith.constant 0 : index
    %c0_23 = arith.constant 0 : index
    %29 = vector.load %arg5[%c0_21, %c2, %c0_22, %c0_23] : memref<1x4x8x8xbf16, #tpu.memory_space<vmem>>, vector<1x1x8x8xbf16>
    %30 = vector.shape_cast %29 : vector<1x1x8x8xbf16> to vector<8x8xbf16>
    %31 = vector.shape_cast %28 : vector<8x8xbf16> to vector<1x1x8x8xbf16>
    tpu.vector_store %arg5[%c0_21, %c2, %c0_22, %c0_23], %31 {strides = array<i32>} : memref<1x4x8x8xbf16, #tpu.memory_space<vmem>>, vector<1x1x8x8xbf16>,
    %32 = vector.extract_strided_slice %6 {offsets = [0, 48], sizes = [8, 8], strides = [1, 1]} : vector<8x64xf32> to vector<8x8xf32>
    %33 = arith.truncf %32 : vector<8x8xf32> to vector<8x8xbf16>
    %c0_24 = arith.constant 0 : index
    %c2_25 = arith.constant 2 : index
    %c0_26 = arith.constant 0 : index
    %c0_27 = arith.constant 0 : index
    %34 = vector.load %arg6[%c0_24, %c2_25, %c0_26, %c0_27] : memref<1x4x8x8xbf16, #tpu.memory_space<vmem>>, vector<1x1x8x8xbf16>
    %35 = vector.shape_cast %34 : vector<1x1x8x8xbf16> to vector<8x8xbf16>
    %36 = vector.shape_cast %33 : vector<8x8xbf16> to vector<1x1x8x8xbf16>
    tpu.vector_store %arg6[%c0_24, %c2_25, %c0_26, %c0_27], %36 {strides = array<i32>} : memref<1x4x8x8xbf16, #tpu.memory_space<vmem>>, vector<1x1x8x8xbf16>,
    %37 = vector.extract_strided_slice %6 {offsets = [0, 24], sizes = [8, 8], strides = [1, 1]} : vector<8x64xf32> to vector<8x8xf32>
    %38 = arith.truncf %37 : vector<8x8xf32> to vector<8x8xbf16>
    %c0_28 = arith.constant 0 : index
    %c3 = arith.constant 3 : index
    %c0_29 = arith.constant 0 : index
    %c0_30 = arith.constant 0 : index
    %39 = vector.load %arg5[%c0_28, %c3, %c0_29, %c0_30] : memref<1x4x8x8xbf16, #tpu.memory_space<vmem>>, vector<1x1x8x8xbf16>
    %40 = vector.shape_cast %39 : vector<1x1x8x8xbf16> to vector<8x8xbf16>
    %41 = vector.shape_cast %38 : vector<8x8xbf16> to vector<1x1x8x8xbf16>
    tpu.vector_store %arg5[%c0_28, %c3, %c0_29, %c0_30], %41 {strides = array<i32>} : memref<1x4x8x8xbf16, #tpu.memory_space<vmem>>, vector<1x1x8x8xbf16>,
    %42 = vector.extract_strided_slice %6 {offsets = [0, 56], sizes = [8, 8], strides = [1, 1]} : vector<8x64xf32> to vector<8x8xf32>
    %43 = arith.truncf %42 : vector<8x8xf32> to vector<8x8xbf16>
    %c0_31 = arith.constant 0 : index
    %c3_32 = arith.constant 3 : index
    %c0_33 = arith.constant 0 : index
    %c0_34 = arith.constant 0 : index
    %44 = vector.load %arg6[%c0_31, %c3_32, %c0_33, %c0_34] : memref<1x4x8x8xbf16, #tpu.memory_space<vmem>>, vector<1x1x8x8xbf16>
    %45 = vector.shape_cast %44 : vector<1x1x8x8xbf16> to vector<8x8xbf16>
    %46 = vector.shape_cast %43 : vector<8x8xbf16> to vector<1x1x8x8xbf16>
    tpu.vector_store %arg6[%c0_31, %c3_32, %c0_33, %c0_34], %46 {strides = array<i32>} : memref<1x4x8x8xbf16, #tpu.memory_space<vmem>>, vector<1x1x8x8xbf16>,
    return
  }
  func.func @transform_0(%arg0: i32, %arg1: i32) -> (i32, i32, i32) {
    %c0_i32 = arith.constant 0 : i32
    %c0_i32_0 = arith.constant 0 : i32
    return %arg0, %arg1, %c0_i32 : i32, i32, i32
  }
  func.func @transform_1(%arg0: i32, %arg1: i32) -> (i32, i32) {
    %c0_i32 = arith.constant 0 : i32
    %c0_i32_0 = arith.constant 0 : i32
    %c0_i32_1 = arith.constant 0 : i32
    return %c0_i32, %c0_i32_0 : i32, i32
  }
  func.func @transform_2(%arg0: i32, %arg1: i32) -> (i32, i32) {
    %c0_i32 = arith.constant 0 : i32
    %c0_i32_0 = arith.constant 0 : i32
    %c0_i32_1 = arith.constant 0 : i32
    return %c0_i32, %c0_i32_0 : i32, i32
  }
  func.func @transform_3(%arg0: i32, %arg1: i32) -> (i32, i32, i32, i32) {
    %c0_i32 = arith.constant 0 : i32
    %c0_i32_0 = arith.constant 0 : i32
    %c0_i32_1 = arith.constant 0 : i32
    return %arg0, %c0_i32, %arg1, %c0_i32_0 : i32, i32, i32, i32
  }
  func.func @transform_4(%arg0: i32, %arg1: i32) -> (i32, i32, i32, i32) {
    %c0_i32 = arith.constant 0 : i32
    %c0_i32_0 = arith.constant 0 : i32
    %c0_i32_1 = arith.constant 0 : i32
    return %arg0, %c0_i32, %arg1, %c0_i32_0 : i32, i32, i32, i32
  }
}

</mosaic_0001>

<llo_original>
// kernel: tpu_custom_call.1
$region0: #{tpu_custom_call.1}
  #allocation0 [shape = 'u32[]', space=smem, size = 0x4, offset = 0x4, fixed_abs, tag = 'smem constant byte address 0x4 - core index']
  #allocation1 [shape = 'u32[72,128]{1,0:T(1,128)}', space=vmem, size = 0x9000, scoped, tag = 'internal scratch']
  %s0 = inlined_call_operand.hbm [shape: bf16[2,8,32], index: 0, kind: input, shape index: {}]
  %s1 = inlined_call_operand.hbm [shape: bf16[32,64], index: 1, kind: input, shape index: {}]
  %s2 = inlined_call_operand.vmem [shape: f32[1,64], index: 2, kind: input, shape index: {}]
  %s3 = inlined_call_operand.hbm [shape: bf16[2,4,8,8], index: 3, kind: output, shape index: {0}]
  %s4 = inlined_call_operand.hbm [shape: bf16[2,4,8,8], index: 4, kind: output, shape index: {1}]
  %5 = xla_tuple %s3, %s4
  %s6 = sld [smem:[#allocation0]]
  $region61: #{tpu_custom_call.1} parent=0
    _
  %s8 = ssub.s32 1, %s6
  %s9 = scalar_select 0, %s8, %s6
  $region1: #{tpu_custom_call.1} parent=0
    #allocation2 [shape = 'u8[4096]{0}', space=vmem, size = 0x1000, scoped, tag = 'input window, operand 0']
    #allocation3 [shape = 's32[2]{0}', space=sflag, size = 0x8, scoped, tag = 'scoped memory for tpu_custom_call.1']
    #allocation4 [shape = 's32[2]{0}', space=sflag, size = 0x8, scoped, tag = 'scoped memory for tpu_custom_call.1']
    #allocation5 [shape = 'u8[8192]{0}', space=vmem, size = 0x2000, scoped, tag = 'input window, operand 1, single buffered']
    #allocation6 [shape = 's32[1]{0}', space=sflag, size = 0x4, scoped, tag = 'scoped memory for tpu_custom_call.1']
    #allocation7 [shape = 'u8[16384]{0}', space=vmem, size = 0x4000, scoped, tag = 'output window, operand 0']
    #allocation8 [shape = 'u8[16384]{0}', space=vmem, size = 0x4000, scoped, tag = 'output window, operand 1']
    #allocation9 [shape = 's32[2]{0}', space=sflag, size = 0x8, scoped, tag = 'scoped memory for tpu_custom_call.1']
    %10 = vsyncpa [#allocation3], 0
    %s11 = scalar_lea.sflag [#allocation3], 1
    %12 = vsyncpa %s11, 0
    %13 = vsyncpa [#allocation6], 0
    %14 = vsyncpa [#allocation4], 0
    %s15 = scalar_lea.sflag [#allocation4], 1
    %16 = vsyncpa %s15, 0
    %17 = vsyncpa [#allocation9], 0
    %s18 = scalar_lea.sflag [#allocation9], 1
    %19 = vsyncpa %s18, 0
    loop: start=0, step=1, limit=4
    $region2: #{tpu_custom_call.1} parent=1 // loop_pre_header
      _
    $region3: #{tpu_custom_call.1} parent=1 // loop_header
      %s21 = sphi 0, %s25
      %p22 = scmp.ge.s32.totalorder %s21, 4
      %s28 = sphi 0, %s40
      %s29 = sphi 0, %s36
      %s30 = sphi 0, %s28
      %s31 = sphi 0, %s29
      %s32 = sphi 0, %s30
      %s33 = sphi 0, %s31
      %s45 = sphi 0, %s47
      %s48 = sphi 0, %s45
      %s49 = sphi 0, %s48
      %s65 = sphi 0, %s49
      %s69 = sphi 0, %s69
      %s71 = sphi 0, %s69
      %s72 = sphi 0, %s71
      %s86 = sphi 0, %s72
      %s90 = sphi 0, %s90
      %s92 = sphi 0, %s90
      %s93 = sphi 0, %s92
      %s107 = sphi 0, %s93
      %s115 = sphi 0, %s117
      %s118 = sphi 0, %s115
      %s119 = sphi 0, %s118
      %s135 = sphi 0, %s119
      %s143 = sphi 0, %s145
      %s146 = sphi 0, %s143
      %s147 = sphi 0, %s146
      %s163 = sphi 0, %s147
    $region4: #{tpu_custom_call.1} parent=1 // loop_header_branch
      %24 = sbr.rel (%p22) target = $region8
    $region5: #{tpu_custom_call.1} parent=1 // loop_body
      %s26 = ssub.s32 %s21, 1
      %s27 = ssub.s32 %s21, 2
      %s34 = sadd.s32 1, %s29
      %p35 = scmp.ge.s32.totalorder %s34, 1
      %s36 = scalar_select %p35, 0, %s34
      %s37 = sadd.s32 1, %s28
      %s38 = scalar_select %p35, %s37, %s28
      %p39 = scmp.ge.s32.totalorder %s38, 2
      %s40 = scalar_select %p39, 0, %s38
      %s41 = ssub.s32 %s28, %s40
      %s42 = ssub.s32 %s29, %s36
      %s43 = sor.u32 %s41, %s42
      %p44 = scmp.eq.s32.totalorder %s43, 0
      %s46 = sadd.s32 %s45, 1
      %s47 = scalar_select %p44, %s45, %s46
      %p50 = pneg %p44
      %p51 = scmp.eq.s32.totalorder %s21, 1
      %p52 = por %p50, %p51
      %p53 = scmp.ne.s32.totalorder %s45, %s48
      %p54 = scmp.eq.s32.totalorder %s21, 0
      %p55 = por %p53, %p54
      %p56 = scmp.ne.s32.totalorder %s45, %s48
      %p57 = scmp.eq.s32.totalorder %s26, 1
      %p58 = por %p56, %p57
      %p59 = scmp.ne.s32.totalorder %s48, %s49
      %p60 = scmp.eq.s32.totalorder %s26, 0
      %p61 = por %p59, %p60
      %p62 = scmp.ne.s32.totalorder %s48, %s49
      %p63 = scmp.eq.s32.totalorder %s27, 1
      %p64 = por %p62, %p63
      %p66 = scmp.ne.s32.totalorder %s49, %s65
      %p67 = scmp.eq.s32.totalorder %s27, 0
      %p68 = por %p66, %p67
      %s70 = sadd.s32 %s69, 1
      %p73 = scmp.eq.s32.totalorder %s21, 1
      %p74 = scmp.ne.s32.totalorder %s69, %s71
      %p75 = scmp.eq.s32.totalorder %s21, 0
      %p76 = por %p74, %p75
      %p77 = scmp.ne.s32.totalorder %s69, %s71
      %p78 = scmp.eq.s32.totalorder %s26, 1
      %p79 = por %p77, %p78
      %p80 = scmp.ne.s32.totalorder %s71, %s72
      %p81 = scmp.eq.s32.totalorder %s26, 0
      %p82 = por %p80, %p81
      %p83 = scmp.ne.s32.totalorder %s71, %s72
      %p84 = scmp.eq.s32.totalorder %s27, 1
      %p85 = por %p83, %p84
      %p87 = scmp.ne.s32.totalorder %s72, %s86
      %p88 = scmp.eq.s32.totalorder %s27, 0
      %p89 = por %p87, %p88
      %s91 = sadd.s32 %s90, 1
      %p94 = scmp.eq.s32.totalorder %s21, 1
      %p95 = scmp.ne.s32.totalorder %s90, %s92
      %p96 = scmp.eq.s32.totalorder %s21, 0
      %p97 = por %p95, %p96
      %p98 = scmp.ne.s32.totalorder %s90, %s92
      %p99 = scmp.eq.s32.totalorder %s26, 1
      %p100 = por %p98, %p99
      %p101 = scmp.ne.s32.totalorder %s92, %s93
      %p102 = scmp.eq.s32.totalorder %s26, 0
      %p103 = por %p101, %p102
      %p104 = scmp.ne.s32.totalorder %s92, %s93
      %p105 = scmp.eq.s32.totalorder %s27, 1
      %p106 = por %p104, %p105
      %p108 = scmp.ne.s32.totalorder %s93, %s107
      %p109 = scmp.eq.s32.totalorder %s27, 0
      %p110 = por %p108, %p109
      %s111 = ssub.s32 %s28, %s40
      %s112 = ssub.s32 %s29, %s36
      %s113 = sor.u32 %s111, %s112
      %p114 = scmp.eq.s32.totalorder %s113, 0
      %s116 = sadd.s32 %s115, 1
      %s117 = scalar_select %p114, %s115, %s116
      %p120 = pneg %p114
      %p121 = scmp.eq.s32.totalorder %s21, 1
      %p122 = por %p120, %p121
      %p123 = scmp.ne.s32.totalorder %s115, %s118
      %p124 = scmp.eq.s32.totalorder %s21, 0
      %p125 = por %p123, %p124
      %p126 = scmp.ne.s32.totalorder %s115, %s118
      %p127 = scmp.eq.s32.totalorder %s26, 1
      %p128 = por %p126, %p127
      %p129 = scmp.ne.s32.totalorder %s118, %s119
      %p130 = scmp.eq.s32.totalorder %s26, 0
      %p131 = por %p129, %p130
      %p132 = scmp.ne.s32.totalorder %s118, %s119
      %p133 = scmp.eq.s32.totalorder %s27, 1
      %p134 = por %p132, %p133
      %p136 = scmp.ne.s32.totalorder %s119, %s135
      %p137 = scmp.eq.s32.totalorder %s27, 0
      %p138 = por %p136, %p137
      %s139 = ssub.s32 %s28, %s40
      %s140 = ssub.s32 %s29, %s36
      %s141 = sor.u32 %s139, %s140
      %p142 = scmp.eq.s32.totalorder %s141, 0
      %s144 = sadd.s32 %s143, 1
      %s145 = scalar_select %p142, %s143, %s144
      %p148 = pneg %p142
      %p149 = scmp.eq.s32.totalorder %s21, 1
      %p150 = por %p148, %p149
      %p151 = scmp.ne.s32.totalorder %s143, %s146
      %p152 = scmp.eq.s32.totalorder %s21, 0
      %p153 = por %p151, %p152
      %p154 = scmp.ne.s32.totalorder %s143, %s146
      %p155 = scmp.eq.s32.totalorder %s26, 1
      %p156 = por %p154, %p155
      %p157 = scmp.ne.s32.totalorder %s146, %s147
      %p158 = scmp.eq.s32.totalorder %s26, 0
      %p159 = por %p157, %p158
      %p160 = scmp.ne.s32.totalorder %s146, %s147
      %p161 = scmp.eq.s32.totalorder %s27, 1
      %p162 = por %p160, %p161
      %p164 = scmp.ne.s32.totalorder %s147, %s163
      %p165 = scmp.eq.s32.totalorder %s27, 0
      %p166 = por %p164, %p165
      %p167 = scmp.le.s32.totalorder 1, %s21
      %p168 = scmp.lt.s32.totalorder %s21, 3
      %p169 = pnand %p167, %p168
      %p170 = pneg %p169
      // Predicated region
      $region9: #{tpu_custom_call.1} parent=5 // pred_check
        _
      $region10: #{tpu_custom_call.1} parent=5 // pred_check_branch
        %172 = sbr.rel (%p169) target = $region12
      $region11: #{tpu_custom_call.1} parent=5 // pred_region
        %s173 = ssub.s32 %s21, 1
        // Predicated region
        $region13: #{tpu_custom_call.1} parent=11 // pred_check
          %p174 = pneg %p82
        $region14: #{tpu_custom_call.1} parent=11 // pred_check_branch
          %176 = sbr.rel (%p174) target = $region16
        $region15: #{tpu_custom_call.1} parent=11 // pred_region
          %178 = vsyncadd [#allocation6], 0
          %s179 = sshll.u32 %s1, 4
          %s180 = int_to_ptr.hbm [resolvable:$true] %s179
          %s181 = sshll.u32 [#allocation5], 4
          %s182 = int_to_ptr.vmem [resolvable:$true] %s181
          %187 = dma.hbm_to_vmem [thread:$0]  %s180, 256, %s182, [#allocation6], 64, 64, 4
        $region16: #{tpu_custom_call.1} parent=11 // pred_fallthru
          _
        // Predicated region
        $region17: #{tpu_custom_call.1} parent=11 // pred_check
          %p188 = pneg %p103
        $region18: #{tpu_custom_call.1} parent=11 // pred_check_branch
          %190 = sbr.rel (%p188) target = $region20
        $region19: #{tpu_custom_call.1} parent=11 // pred_region
          _
        $region20: #{tpu_custom_call.1} parent=11 // pred_fallthru
          _
      $region12: #{tpu_custom_call.1} parent=5 // pred_fallthru
        _
      %p191 = scmp.lt.s32.totalorder %s21, 2
      // Predicated region
      $region21: #{tpu_custom_call.1} parent=5 // pred_check
        %p192 = pneg %p191
      $region22: #{tpu_custom_call.1} parent=5 // pred_check_branch
        %194 = sbr.rel (%p192) target = $region24
      $region23: #{tpu_custom_call.1} parent=5 // pred_region
        // Predicated region
        $region25: #{tpu_custom_call.1} parent=23 // pred_check
          %p195 = pneg %p55
        $region26: #{tpu_custom_call.1} parent=23 // pred_check_branch
          %197 = sbr.rel (%p195) target = $region28
        $region27: #{tpu_custom_call.1} parent=23 // pred_region
          %s198 = sand.u32 %s45, 1
          %s199 = scalar_lea.sflag [#allocation3], %s198
          %s200 = sand.u32 %s45, 1
          %s201 = smul.addr %s200, 4
          %s202 = scalar_lea.vmem [#allocation2], %s201
          %204 = vsyncadd %s199, 0
          %s205 = sadd.s32 %s29, %s28
          %s206 = smul.addr %s205, 4
          %s207 = scalar_lea.hbm %s0, %s206
          %s209 = sshll.u32 %s207, 4
          %s210 = int_to_ptr.hbm [resolvable:$true] %s209
          %s211 = sshll.u32 %s202, 4
          %s212 = int_to_ptr.vmem [resolvable:$true] %s211
          %214 = dma.hbm_to_vmem [thread:$0]  %s210, 64, %s212, %s199
        $region28: #{tpu_custom_call.1} parent=23 // pred_fallthru
          _
      $region24: #{tpu_custom_call.1} parent=5 // pred_fallthru
        _
      %p215 = scmp.le.s32.totalorder 1, %s21
      %p216 = scmp.lt.s32.totalorder %s21, 3
      %p217 = pnand %p215, %p216
      %p218 = pneg %p217
      // Predicated region
      $region29: #{tpu_custom_call.1} parent=5 // pred_check
        _
      $region30: #{tpu_custom_call.1} parent=5 // pred_check_branch
        %220 = sbr.rel (%p217) target = $region32
      $region31: #{tpu_custom_call.1} parent=5 // pred_region
        %s221 = ssub.s32 %s21, 1
        %s222 = sand.u32 %s48, 1
        %s223 = scalar_lea.sflag [#allocation3], %s222
        %s224 = sand.u32 %s48, 1
        %s225 = smul.addr %s224, 4
        %s226 = scalar_lea.vmem [#allocation2], %s225
        // Predicated region
        $region33: #{tpu_custom_call.1} parent=31 // pred_check
          %p227 = pneg %p61
        $region34: #{tpu_custom_call.1} parent=31 // pred_check_branch
          %229 = sbr.rel (%p227) target = $region36
        $region35: #{tpu_custom_call.1} parent=31 // pred_region
          %231 = dma.done %s223, 64
        $region36: #{tpu_custom_call.1} parent=31 // pred_fallthru
          _
        // Predicated region
        $region37: #{tpu_custom_call.1} parent=31 // pred_check
          %p232 = pneg %p82
        $region38: #{tpu_custom_call.1} parent=31 // pred_check_branch
          %234 = sbr.rel (%p232) target = $region40
        $region39: #{tpu_custom_call.1} parent=31 // pred_region
          %236 = dma.done [#allocation6], 256
        $region40: #{tpu_custom_call.1} parent=31 // pred_fallthru
          _
        %s237 = sand.u32 %s48, 1
        %s238 = scalar_lea.sflag [#allocation3], %s237
        %s239 = sand.u32 %s48, 1
        %s240 = smul.addr %s239, 4
        %s241 = scalar_lea.vmem [#allocation2], %s240
        %p242 = pneg %p61
        %p243 = pneg %p58
        %p244 = pneg %p82
        %p245 = pneg %p79
        %p246 = pneg %p103
        %p247 = pneg %p100
        %p248 = pneg %p131
        %p249 = pneg %p128
        %s250 = sand.u32 %s118, 1
        %s251 = scalar_lea.sflag [#allocation4], %s250
        %s252 = sand.u32 %s118, 1
        %s253 = smul.addr %s252, 16
        %s254 = scalar_lea.vmem [#allocation7], %s253
        %p255 = pneg %p159
        %p256 = pneg %p156
        %s257 = sand.u32 %s146, 1
        %s258 = scalar_lea.sflag [#allocation9], %s257
        %s259 = sand.u32 %s146, 1
        %s260 = smul.addr %s259, 16
        %s261 = scalar_lea.vmem [#allocation8], %s260
        %v263 = vld [vmem:[%s226] sm:$0xf]
        %v264 = vld [vmem:[#allocation5] sm:$0xf]
        %v265 = vld [vmem:[#allocation5 + $0x4] sm:$0xf]
        %v266 = vld [vmem:[#allocation5 + $0x8] sm:$0xf]
        %v267 = vld [vmem:[#allocation5 + $0xc] sm:$0xf]
        %v268 = vld [vmem:[%s2] sm:$0x1]
        %v270 = vperm.slane %v268, 0
        %v276 = vunpack.c.l.b16 %v264
        %v277 = vunpack.c.l.b16 %v265
        %v278 = vunpack.c.l.b16 %v266
        %v279 = vunpack.c.l.b16 %v267
        %v280 = vpack.c.b16 %v277, %v276
        %v281 = vpack.c.b16 %v279, %v278
        %vm284 = vcmask 261120
        %v286 = vsel %vm284, %v263, 0
        %288 = vmatpush.bf16.msra.mxu0 0
        %289 = vmatpush.bf16.msra.mxu0 0
        %290 = vmatpush.bf16.msra.mxu0 0
        %291 = vmatpush.bf16.msra.mxu0 0
        %292 = vmatpush.bf16.msra.mxu0 0
        %293 = vmatpush.bf16.msra.mxu0 0
        %294 = vmatpush.bf16.msra.mxu0 %v281
        %295 = vmatpush.bf16.msra.mxu0 %v280
        %296 = vmatmul.bf16.gmra.mxu0 %v286
        %v297 = vpop.f32.mrf.mxu0
        %v298 = vadd.f32 %v270, %v297
        %v299 = vpop.f32.mrf.mxu0
        %300 = vdwg.mxu0
        %v301 = vpack.c.bf16 %v298, %v298
        %vm302 = vcmask 60416
        %303 = vst.msk [vmem:[%s254] sm:$0xf] %vm302, %v301
        %305 = vrot.lane.b32.xlu0 %v301, 96
        %v306 = vpop.permute.xlu0 %305
        %308 = vst.msk [vmem:[%s261] sm:$0xf] %vm302, %v306
        %309 = vrot.lane.b32.xlu0 %v301, 120
        %v310 = vpop.permute.xlu0 %309
        %s312 = scalar_lea.vmem %s254, 4 [#allocation7]
        %313 = vst.msk [vmem:[%s312] sm:$0xf] %vm302, %v310
        %314 = vrot.lane.b32.xlu0 %v301, 88
        %v315 = vpop.permute.xlu0 %314
        %s317 = scalar_lea.vmem %s261, 4 [#allocation8]
        %318 = vst.msk [vmem:[%s317] sm:$0xf] %vm302, %v315
        %319 = vrot.lane.b32.xlu0 %v301, 112
        %v320 = vpop.permute.xlu0 %319
        %s322 = scalar_lea.vmem %s254, 8 [#allocation7]
        %323 = vst.msk [vmem:[%s322] sm:$0xf] %vm302, %v320
        %324 = vrot.lane.b32.xlu0 %v301, 80
        %v325 = vpop.permute.xlu0 %324
        %s327 = scalar_lea.vmem %s261, 8 [#allocation8]
        %328 = vst.msk [vmem:[%s327] sm:$0xf] %vm302, %v325
        %329 = vrot.lane.b32.xlu0 %v301, 104
        %v330 = vpop.permute.xlu0 %329
        %s332 = scalar_lea.vmem %s254, 12 [#allocation7]
        %333 = vst.msk [vmem:[%s332] sm:$0xf] %vm302, %v330
        %334 = vrot.lane.b32.xlu0 %v301, 72
        %v335 = vpop.permute.xlu0 %334
        %s337 = scalar_lea.vmem %s261, 12 [#allocation8]
        %338 = vst.msk [vmem:[%s337] sm:$0xf] %vm302, %v335
        %s339 = sand.u32 %s118, 1
        %s340 = scalar_lea.sflag [#allocation4], %s339
        %s341 = sand.u32 %s118, 1
        %s342 = smul.addr %s341, 16
        %s343 = scalar_lea.vmem [#allocation7], %s342
        %s344 = sand.u32 %s146, 1
        %s345 = scalar_lea.sflag [#allocation9], %s344
        %s346 = sand.u32 %s146, 1
        %s347 = smul.addr %s346, 16
        %s348 = scalar_lea.vmem [#allocation8], %s347
        // Predicated region
        $region41: #{tpu_custom_call.1} parent=31 // pred_check
          %p349 = pneg %p128
        $region42: #{tpu_custom_call.1} parent=31 // pred_check_branch
          %351 = sbr.rel (%p349) target = $region44
        $region43: #{tpu_custom_call.1} parent=31 // pred_region
          %353 = vsyncadd %s340, 0
          %s354 = smul.addr %s30, 4
          %s355 = sadd.s32 %s31, %s354
          %s356 = smul.addr %s355, 4
          %s357 = scalar_lea.hbm %s3, %s356
          %s358 = sshll.u32 %s343, 4
          %s359 = int_to_ptr.vmem [resolvable:$true] %s358
          %s360 = sshll.u32 %s357, 4
          %s361 = int_to_ptr.hbm [resolvable:$true] %s360
          %366 = dma.vmem_to_hbm [thread:$0]  %s359, 256, %s361, %s340, 64, 64, 4
        $region44: #{tpu_custom_call.1} parent=31 // pred_fallthru
          _
        // Predicated region
        $region45: #{tpu_custom_call.1} parent=31 // pred_check
          %p367 = pneg %p156
        $region46: #{tpu_custom_call.1} parent=31 // pred_check_branch
          %369 = sbr.rel (%p367) target = $region48
        $region47: #{tpu_custom_call.1} parent=31 // pred_region
          %371 = vsyncadd %s345, 0
          %s372 = smul.addr %s30, 4
          %s373 = sadd.s32 %s31, %s372
          %s374 = smul.addr %s373, 4
          %s375 = scalar_lea.hbm %s4, %s374
          %s376 = sshll.u32 %s348, 4
          %s377 = int_to_ptr.vmem [resolvable:$true] %s376
          %s378 = sshll.u32 %s375, 4
          %s379 = int_to_ptr.hbm [resolvable:$true] %s378
          %384 = dma.vmem_to_hbm [thread:$0]  %s377, 256, %s379, %s345, 64, 64, 4
        $region48: #{tpu_custom_call.1} parent=31 // pred_fallthru
          _
      $region32: #{tpu_custom_call.1} parent=5 // pred_fallthru
        _
      %p385 = scmp.le.s32.totalorder 2, %s21
      // Predicated region
      $region49: #{tpu_custom_call.1} parent=5 // pred_check
        %p386 = pneg %p385
      $region50: #{tpu_custom_call.1} parent=5 // pred_check_branch
        %388 = sbr.rel (%p386) target = $region52
      $region51: #{tpu_custom_call.1} parent=5 // pred_region
        %s389 = ssub.s32 %s21, 2
        // Predicated region
        $region53: #{tpu_custom_call.1} parent=51 // pred_check
          %p390 = pneg %p134
        $region54: #{tpu_custom_call.1} parent=51 // pred_check_branch
          %392 = sbr.rel (%p390) target = $region56
        $region55: #{tpu_custom_call.1} parent=51 // pred_region
          %s393 = sand.u32 %s119, 1
          %s394 = scalar_lea.sflag [#allocation4], %s393
          %s395 = sand.u32 %s119, 1
          %s396 = smul.addr %s395, 16
          %s397 = scalar_lea.vmem [#allocation7], %s396
          %399 = dma.done %s394, 256
        $region56: #{tpu_custom_call.1} parent=51 // pred_fallthru
          _
        // Predicated region
        $region57: #{tpu_custom_call.1} parent=51 // pred_check
          %p400 = pneg %p162
        $region58: #{tpu_custom_call.1} parent=51 // pred_check_branch
          %402 = sbr.rel (%p400) target = $region60
        $region59: #{tpu_custom_call.1} parent=51 // pred_region
          %s403 = sand.u32 %s147, 1
          %s404 = scalar_lea.sflag [#allocation9], %s403
          %s405 = sand.u32 %s147, 1
          %s406 = smul.addr %s405, 16
          %s407 = scalar_lea.vmem [#allocation8], %s406
          %409 = dma.done %s404, 256
        $region60: #{tpu_custom_call.1} parent=51 // pred_fallthru
          _
      $region52: #{tpu_custom_call.1} parent=5 // pred_fallthru
        _
    $region6: #{tpu_custom_call.1} parent=1 // loop_footer
      %s25 = sadd.s32 1, %s21
    $region7: #{tpu_custom_call.1} parent=1 // loop_footer_branch
      %20 = sbr.rel target = $region3
    $region8: #{tpu_custom_call.1} parent=1 // loop_exit
      _
    %410 = vsyncpa [#allocation3], 1
    %s411 = scalar_lea.sflag [#allocation3], 1
    %412 = vsyncpa %s411, 1
    %413 = vsyncpa [#allocation6], 1
    %414 = vsyncpa [#allocation4], 1
    %s415 = scalar_lea.sflag [#allocation4], 1
    %416 = vsyncpa %s415, 1
    %417 = vsyncpa [#allocation9], 1
    %s418 = scalar_lea.sflag [#allocation9], 1
    %419 = vsyncpa %s418, 1

</llo_original>
